<compile_context>
chip_gen: v7x
topology: tpu7x:2x2x1
jax: 0.10.0
libtpu: 0.0.40
codegen_flags: <defaults>
</compile_context>

<pallas_src>
import jax
import jax.numpy as jnp
import numpy as np
from jax.experimental import pallas as pl
from jax.experimental.pallas import tpu as pltpu

SELU_ALPHA = 1.6732632423543772
SELU_SCALE = 1.0507009873554805
BN_EPS = 1e-5


def _elu_core(x):
    # SELU without its output scale (scale folded into the next layer's weights).
    return jnp.where(x > 0, x, SELU_ALPHA * (jnp.exp(x) - 1.0))


def linear_z_kernel(
    x_ref,                       # (32, T)   batch on lanes
    w1_ref, b1_ref,              # (16, 32), (16, 1)
    w2_ref, b2_ref,              # (8, 16),  (8, 1)   BN1*SELU_SCALE folded in
    w3_ref, b3_ref,              # (4, 8),   (4, 1)   BN2*SELU_SCALE folded in
    w4_ref, b4_ref,              # (1, 4),   (1, 1)   BN3*SELU_SCALE folded in
    o_ref,                       # (1, T)
):
    x = x_ref[...]

    h = jnp.dot(w1_ref[...], x, preferred_element_type=jnp.float32) + b1_ref[...]
    h = _elu_core(h)

    h = jnp.dot(w2_ref[...], h, preferred_element_type=jnp.float32) + b2_ref[...]
    h = _elu_core(h)

    h = jnp.dot(w3_ref[...], h, preferred_element_type=jnp.float32) + b3_ref[...]
    h = _elu_core(h)

    z = jnp.dot(w4_ref[...], h, preferred_element_type=jnp.float32) + b4_ref[...]
    o_ref[...] = pl.reciprocal(1.0 + jnp.exp(-z), approx=True)


def _round_up(v, m):
    return (v + m - 1) // m * m


def linear_z_forward(x, folded, *, tile=8192):
    """x: (N, 32) float32.  folded: output of fold_params().  Returns (N, 1)."""
    n = x.shape[0]
    # Lane-dense tile, shrunk for small batches; multiple of 128 either way.
    tile = min(tile, _round_up(max(n, 1), 128))
    n_pad = _round_up(n, tile)

    # Batch-on-lanes layout: (32, N), zero-padded along lanes to the tile grid.
    xt = jnp.pad(x.T.astype(jnp.float32), ((0, 0), (0, n_pad - n)))

    args = (
        xt,
        folded["w1"], folded["b1"],
        folded["w2"], folded["b2"],
        folded["w3"], folded["b3"],
        folded["w4"], folded["b4"],
    )

    x_spec = pl.BlockSpec((32, tile), lambda i: (0, i))
    param_specs = [pl.BlockSpec(a.shape, lambda i: (0, 0)) for a in args[1:]]

    out = pl.pallas_call(
        linear_z_kernel,
        out_shape=jax.ShapeDtypeStruct((1, n_pad), jnp.float32),
        grid=(n_pad // tile,),
        in_specs=[x_spec] + param_specs,
        out_specs=pl.BlockSpec((1, tile), lambda i: (0, i)),
        compiler_params=pltpu.CompilerParams(
            dimension_semantics=("parallel",),
        ),
    )(*args)

    return out[:, :n].T  # (N, 1)


def init_raw_params(key):
    """Raw parameters mirroring the PyTorch module (weights stored (out, in))."""
    dims = [(32, 16), (16, 8), (8, 4), (4, 1)]
    params = {}
    keys = jax.random.split(key, 2 * len(dims))
    for i, (fan_in, fan_out) in enumerate(dims):
        bound = 1.0 / np.sqrt(fan_in)
        params[f"w{i + 1}"] = jax.random.uniform(
            keys[2 * i], (fan_out, fan_in), minval=-bound, maxval=bound,
            dtype=jnp.float32)
        params[f"b{i + 1}"] = jax.random.uniform(
            keys[2 * i + 1], (fan_out,), minval=-bound, maxval=bound,
            dtype=jnp.float32)
    # BatchNorm1d eval params: gamma=1, beta=0, running_mean=0, running_var=1.
    for i, width in enumerate([16, 8, 4], start=1):
        params[f"bn{i}_gamma"] = jnp.ones((width,), jnp.float32)
        params[f"bn{i}_beta"] = jnp.zeros((width,), jnp.float32)
        params[f"bn{i}_mean"] = jnp.zeros((width,), jnp.float32)
        params[f"bn{i}_var"] = jnp.ones((width,), jnp.float32)
    return params


def fold_params(raw, eps=BN_EPS):
    """Fold eval-mode BatchNorm and the SELU output scale into the next layer.

    bn_k(x) = s_k * x + t_k with s_k = gamma/sqrt(var+eps), t_k = beta - mean*s_k
    Layer k+1:  W' = W * (s_k * SELU_SCALE) (column scale),  b' = b + W @ t_k
    """
    folded = {
        "w1": raw["w1"],
        "b1": raw["b1"][:, None],
    }
    for i in (1, 2, 3):
        s = raw[f"bn{i}_gamma"] / jnp.sqrt(raw[f"bn{i}_var"] + eps)
        t = raw[f"bn{i}_beta"] - raw[f"bn{i}_mean"] * s
        w_next = raw[f"w{i + 1}"]
        b_next = raw[f"b{i + 1}"]
        folded[f"w{i + 1}"] = w_next * (s * SELU_SCALE)[None, :]
        folded[f"b{i + 1}"] = (b_next + w_next @ t)[:, None]
    return folded


def reference_forward(x, raw, eps=BN_EPS):
    """Pure-JAX eval-mode reference matching the PyTorch module."""
    h = x
    for i in (1, 2, 3):
        h = h @ raw[f"w{i}"].T + raw[f"b{i}"]
        h = SELU_SCALE * jnp.where(h > 0, h, SELU_ALPHA * (jnp.exp(h) - 1.0))
        s = raw[f"bn{i}_gamma"] / jnp.sqrt(raw[f"bn{i}_var"] + eps)
        t = raw[f"bn{i}_beta"] - raw[f"bn{i}_mean"] * s
        h = h * s + t
    z = h @ raw["w4"].T + raw["b4"]
    return jax.nn.sigmoid(z)


if __name__ == "__main__":
    key = jax.random.PRNGKey(0)
    pkey, xkey = jax.random.split(key)

    raw = init_raw_params(pkey)
    folded = fold_params(raw)

    batch = 8
    x = jax.random.normal(xkey, (batch, 32), dtype=jnp.float32)

    out = linear_z_forward(x, folded)
    out = jax.block_until_ready(out)

    assert out.shape == (batch, 1), out.shape
    assert bool(jnp.all((out >= 0.0) & (out <= 1.0))), "sigmoid output out of range"

    ref = reference_forward(x, raw)
    np.testing.assert_allclose(np.asarray(out), np.asarray(ref), atol=2e-3, rtol=2e-3)

    print("KERNEL_OK")
</pallas_src>

<mosaic_0001>
module attributes {stable_mosaic.version = 11 : i64} {
  func.func @linear_z_kernel(%arg0: i32, %arg1: memref<32x128xf32, #tpu.memory_space<vmem>>, %arg2: memref<16x32xf32, #tpu.memory_space<vmem>>, %arg3: memref<16x1xf32, #tpu.memory_space<vmem>>, %arg4: memref<8x16xf32, #tpu.memory_space<vmem>>, %arg5: memref<8x1xf32, #tpu.memory_space<vmem>>, %arg6: memref<4x8xf32, #tpu.memory_space<vmem>>, %arg7: memref<4x1xf32, #tpu.memory_space<vmem>>, %arg8: memref<1x4xf32, #tpu.memory_space<vmem>>, %arg9: memref<1x1xf32, #tpu.memory_space<vmem>>, %arg10: memref<1x128xf32, #tpu.memory_space<vmem>>) attributes {dimension_semantics = [#tpu.dimension_semantics<parallel>], iteration_bounds = array<i64: 1>, scalar_prefetch = 0 : i64, scratch_operands = 0 : i64, tpu.core_type = #tpu.core_type<tc>, window_params = [{transform_indices = @transform_0, window_bounds = array<i64: 32, 128>}, {pipeline_mode = #tpu.pipeline_mode<synchronous>, transform_indices = @transform_1, window_bounds = array<i64: 16, 32>}, {pipeline_mode = #tpu.pipeline_mode<synchronous>, transform_indices = @transform_2, window_bounds = array<i64: 16, 1>}, {pipeline_mode = #tpu.pipeline_mode<synchronous>, transform_indices = @transform_3, window_bounds = array<i64: 8, 16>}, {pipeline_mode = #tpu.pipeline_mode<synchronous>, transform_indices = @transform_4, window_bounds = array<i64: 8, 1>}, {pipeline_mode = #tpu.pipeline_mode<synchronous>, transform_indices = @transform_5, window_bounds = array<i64: 4, 8>}, {pipeline_mode = #tpu.pipeline_mode<synchronous>, transform_indices = @transform_6, window_bounds = array<i64: 4, 1>}, {pipeline_mode = #tpu.pipeline_mode<synchronous>, transform_indices = @transform_7, window_bounds = array<i64: 1, 4>}, {pipeline_mode = #tpu.pipeline_mode<synchronous>, transform_indices = @transform_8, window_bounds = array<i64: 1, 1>}, {transform_indices = @transform_9, window_bounds = array<i64: 1, 128>}]} {
    %c0 = arith.constant 0 : index
    %c0_0 = arith.constant 0 : index
    %0 = vector.load %arg1[%c0, %c0_0] : memref<32x128xf32, #tpu.memory_space<vmem>>, vector<32x128xf32>
    %c0_1 = arith.constant 0 : index
    %c0_2 = arith.constant 0 : index
    %1 = vector.load %arg2[%c0_1, %c0_2] : memref<16x32xf32, #tpu.memory_space<vmem>>, vector<16x32xf32>
    %cst = arith.constant dense<0.000000e+00> : vector<16x128xf32>
    %2 = tpu.matmul %1, %0, %cst {dimension_numbers = #tpu.dot_dimension_numbers<[1], [0], [0], [1], [0, 0, 1, 1], [], []>} : vector<16x32xf32>, vector<32x128xf32>, vector<16x128xf32> -> vector<16x128xf32>
    %c0_3 = arith.constant 0 : index
    %c0_4 = arith.constant 0 : index
    %3 = vector.load %arg3[%c0_3, %c0_4] : memref<16x1xf32, #tpu.memory_space<vmem>>, vector<16x1xf32>
    %4 = vector.broadcast %3 : vector<16x1xf32> to vector<16x128xf32>
    %5 = arith.addf %2, %4 : vector<16x128xf32>
    %cst_5 = arith.constant 0.000000e+00 : f32
    %6 = vector.broadcast %cst_5 : f32 to vector<16x128xf32>
    %7 = arith.cmpf ogt, %5, %6 : vector<16x128xf32>
    %8 = math.exp %5 : vector<16x128xf32>
    %cst_6 = arith.constant 1.000000e+00 : f32
    %9 = vector.broadcast %cst_6 : f32 to vector<16x128xf32>
    %10 = arith.subf %8, %9 : vector<16x128xf32>
    %cst_7 = arith.constant 1.67326319 : f32
    %11 = vector.broadcast %cst_7 : f32 to vector<16x128xf32>
    %12 = arith.mulf %11, %10 : vector<16x128xf32>
    %13 = arith.select %7, %5, %12 : vector<16x128xi1>, vector<16x128xf32>
    %c0_8 = arith.constant 0 : index
    %c0_9 = arith.constant 0 : index
    %14 = vector.load %arg4[%c0_8, %c0_9] : memref<8x16xf32, #tpu.memory_space<vmem>>, vector<8x16xf32>
    %cst_10 = arith.constant dense<0.000000e+00> : vector<8x128xf32>
    %15 = tpu.matmul %14, %13, %cst_10 {dimension_numbers = #tpu.dot_dimension_numbers<[1], [0], [0], [1], [0, 0, 1, 1], [], []>} : vector<8x16xf32>, vector<16x128xf32>, vector<8x128xf32> -> vector<8x128xf32>
    %c0_11 = arith.constant 0 : index
    %c0_12 = arith.constant 0 : index
    %16 = vector.load %arg5[%c0_11, %c0_12] : memref<8x1xf32, #tpu.memory_space<vmem>>, vector<8x1xf32>
    %17 = vector.broadcast %16 : vector<8x1xf32> to vector<8x128xf32>
    %18 = arith.addf %15, %17 : vector<8x128xf32>
    %cst_13 = arith.constant 0.000000e+00 : f32
    %19 = vector.broadcast %cst_13 : f32 to vector<8x128xf32>
    %20 = arith.cmpf ogt, %18, %19 : vector<8x128xf32>
    %21 = math.exp %18 : vector<8x128xf32>
    %cst_14 = arith.constant 1.000000e+00 : f32
    %22 = vector.broadcast %cst_14 : f32 to vector<8x128xf32>
    %23 = arith.subf %21, %22 : vector<8x128xf32>
    %cst_15 = arith.constant 1.67326319 : f32
    %24 = vector.broadcast %cst_15 : f32 to vector<8x128xf32>
    %25 = arith.mulf %24, %23 : vector<8x128xf32>
    %26 = arith.select %20, %18, %25 : vector<8x128xi1>, vector<8x128xf32>
    %c0_16 = arith.constant 0 : index
    %c0_17 = arith.constant 0 : index
    %27 = vector.load %arg6[%c0_16, %c0_17] : memref<4x8xf32, #tpu.memory_space<vmem>>, vector<4x8xf32>
    %cst_18 = arith.constant dense<0.000000e+00> : vector<4x128xf32>
    %28 = tpu.matmul %27, %26, %cst_18 {dimension_numbers = #tpu.dot_dimension_numbers<[1], [0], [0], [1], [0, 0, 1, 1], [], []>} : vector<4x8xf32>, vector<8x128xf32>, vector<4x128xf32> -> vector<4x128xf32>
    %c0_19 = arith.constant 0 : index
    %c0_20 = arith.constant 0 : index
    %29 = vector.load %arg7[%c0_19, %c0_20] : memref<4x1xf32, #tpu.memory_space<vmem>>, vector<4x1xf32>
    %30 = vector.broadcast %29 : vector<4x1xf32> to vector<4x128xf32>
    %31 = arith.addf %28, %30 : vector<4x128xf32>
    %cst_21 = arith.constant 0.000000e+00 : f32
    %32 = vector.broadcast %cst_21 : f32 to vector<4x128xf32>
    %33 = arith.cmpf ogt, %31, %32 : vector<4x128xf32>
    %34 = math.exp %31 : vector<4x128xf32>
    %cst_22 = arith.constant 1.000000e+00 : f32
    %35 = vector.broadcast %cst_22 : f32 to vector<4x128xf32>
    %36 = arith.subf %34, %35 : vector<4x128xf32>
    %cst_23 = arith.constant 1.67326319 : f32
    %37 = vector.broadcast %cst_23 : f32 to vector<4x128xf32>
    %38 = arith.mulf %37, %36 : vector<4x128xf32>
    %39 = arith.select %33, %31, %38 : vector<4x128xi1>, vector<4x128xf32>
    %c0_24 = arith.constant 0 : index
    %c0_25 = arith.constant 0 : index
    %40 = vector.load %arg8[%c0_24, %c0_25] : memref<1x4xf32, #tpu.memory_space<vmem>>, vector<1x4xf32>
    %cst_26 = arith.constant dense<0.000000e+00> : vector<1x128xf32>
    %41 = tpu.matmul %40, %39, %cst_26 {dimension_numbers = #tpu.dot_dimension_numbers<[1], [0], [0], [1], [0, 0, 1, 1], [], []>} : vector<1x4xf32>, vector<4x128xf32>, vector<1x128xf32> -> vector<1x128xf32>
    %c0_27 = arith.constant 0 : index
    %c0_28 = arith.constant 0 : index
    %42 = vector.load %arg9[%c0_27, %c0_28] : memref<1x1xf32, #tpu.memory_space<vmem>>, vector<1x1xf32>
    %43 = vector.broadcast %42 : vector<1x1xf32> to vector<1x128xf32>
    %44 = arith.addf %41, %43 : vector<1x128xf32>
    %cst_29 = arith.constant 0.000000e+00 : f32
    %45 = vector.broadcast %cst_29 : f32 to vector<1x128xf32>
    %46 = arith.subf %45, %44 : vector<1x128xf32>
    %47 = math.exp %46 : vector<1x128xf32>
    %cst_30 = arith.constant 1.000000e+00 : f32
    %48 = vector.broadcast %cst_30 : f32 to vector<1x128xf32>
    %49 = arith.addf %48, %47 : vector<1x128xf32>
    %50 = tpu.reciprocal %49 {approx = true} : vector<1x128xf32> -> vector<1x128xf32>
    %c0_31 = arith.constant 0 : index
    %c0_32 = arith.constant 0 : index
    %51 = vector.load %arg10[%c0_31, %c0_32] : memref<1x128xf32, #tpu.memory_space<vmem>>, vector<1x128xf32>
    tpu.vector_store %arg10[%c0_31, %c0_32], %50 {strides = array<i32>} : memref<1x128xf32, #tpu.memory_space<vmem>>, vector<1x128xf32>,
    return
  }
  func.func @transform_0(%arg0: i32) -> (i32, i32) {
    %c0_i32 = arith.constant 0 : i32
    %c0_i32_0 = arith.constant 0 : i32
    return %c0_i32, %arg0 : i32, i32
  }
  func.func @transform_1(%arg0: i32) -> (i32, i32) {
    %c0_i32 = arith.constant 0 : i32
    %c0_i32_0 = arith.constant 0 : i32
    %c0_i32_1 = arith.constant 0 : i32
    return %c0_i32, %c0_i32_0 : i32, i32
  }
  func.func @transform_2(%arg0: i32) -> (i32, i32) {
    %c0_i32 = arith.constant 0 : i32
    %c0_i32_0 = arith.constant 0 : i32
    %c0_i32_1 = arith.constant 0 : i32
    return %c0_i32, %c0_i32_0 : i32, i32
  }
  func.func @transform_3(%arg0: i32) -> (i32, i32) {
    %c0_i32 = arith.constant 0 : i32
    %c0_i32_0 = arith.constant 0 : i32
    %c0_i32_1 = arith.constant 0 : i32
    return %c0_i32, %c0_i32_0 : i32, i32
  }
  func.func @transform_4(%arg0: i32) -> (i32, i32) {
    %c0_i32 = arith.constant 0 : i32
    %c0_i32_0 = arith.constant 0 : i32
    %c0_i32_1 = arith.constant 0 : i32
    return %c0_i32, %c0_i32_0 : i32, i32
  }
  func.func @transform_5(%arg0: i32) -> (i32, i32) {
    %c0_i32 = arith.constant 0 : i32
    %c0_i32_0 = arith.constant 0 : i32
    %c0_i32_1 = arith.constant 0 : i32
    return %c0_i32, %c0_i32_0 : i32, i32
  }
  func.func @transform_6(%arg0: i32) -> (i32, i32) {
    %c0_i32 = arith.constant 0 : i32
    %c0_i32_0 = arith.constant 0 : i32
    %c0_i32_1 = arith.constant 0 : i32
    return %c0_i32, %c0_i32_0 : i32, i32
  }
  func.func @transform_7(%arg0: i32) -> (i32, i32) {
    %c0_i32 = arith.constant 0 : i32
    %c0_i32_0 = arith.constant 0 : i32
    %c0_i32_1 = arith.constant 0 : i32
    return %c0_i32, %c0_i32_0 : i32, i32
  }
  func.func @transform_8(%arg0: i32) -> (i32, i32) {
    %c0_i32 = arith.constant 0 : i32
    %c0_i32_0 = arith.constant 0 : i32
    %c0_i32_1 = arith.constant 0 : i32
    return %c0_i32, %c0_i32_0 : i32, i32
  }
  func.func @transform_9(%arg0: i32) -> (i32, i32) {
    %c0_i32 = arith.constant 0 : i32
    %c0_i32_0 = arith.constant 0 : i32
    return %c0_i32, %arg0 : i32, i32
  }
}

</mosaic_0001>

<llo_original>
// kernel: tpu_custom_call.1
$region0: #{tpu_custom_call.1}
  #allocation0 [shape = 'u32[]', space=smem, size = 0x4, offset = 0x4, fixed_abs, tag = 'smem constant byte address 0x4 - core index']
  #allocation1 [shape = 'u32[144,128]{1,0:T(1,128)}', space=vmem, size = 0x12000, scoped, tag = 'internal scratch']
  #allocation2 [shape = 'f32[1,1]{1,0:T(1,128)S(1)}', space=vmem, size = 0x200, scoped, tag = 'scoped memory for tpu_custom_call.1']
  %s0 = inlined_call_operand.vmem [shape: f32[32,128], index: 0, kind: input, shape index: {}]
  %s1 = inlined_call_operand.hbm [shape: f32[16,32], index: 1, kind: input, shape index: {}]
  %s2 = inlined_call_operand.vmem [shape: f32[16,1], index: 2, kind: input, shape index: {}]
  %s3 = inlined_call_operand.vmem [shape: f32[8,16], index: 3, kind: input, shape index: {}]
  %s4 = inlined_call_operand.vmem [shape: f32[8,1], index: 4, kind: input, shape index: {}]
  %s5 = inlined_call_operand.vmem [shape: f32[4,8], index: 5, kind: input, shape index: {}]
  %s6 = inlined_call_operand.vmem [shape: f32[4,1], index: 6, kind: input, shape index: {}]
  %s7 = inlined_call_operand.vmem [shape: f32[1,4], index: 7, kind: input, shape index: {}]
  %s8 = inlined_call_operand.<no memory space> [shape: f32[1,1], index: 8, kind: input, shape index: {}]
  %s9 = inlined_call_operand.hbm [shape: f32[1,128], index: 9, kind: output, shape index: {}]
  %s10 = sld [smem:[#allocation0]]
  $region50: #{tpu_custom_call.1} parent=0
    _
  %s12 = ssub.s32 1, %s10
  %s13 = scalar_select 0, %s12, %s10
  %v14 = vstv %s8
  %15 = vst [vmem:[#allocation2] sm:$0x1] %v14
  $region1: #{tpu_custom_call.1} parent=0
    #allocation3 [shape = 'u8[8192]{0}', space=vmem, size = 0x2000, scoped, tag = 'input window, operand 1, single buffered']
    #allocation4 [shape = 's32[1]{0}', space=sflag, size = 0x4, scoped, tag = 'scoped memory for tpu_custom_call.1']
    #allocation5 [shape = 's32[1]{0}', space=sflag, size = 0x4, scoped, tag = 'scoped memory for tpu_custom_call.1']
    #allocation6 [shape = 'u8[512]{0}', space=vmem, size = 0x400, scoped, tag = 'output window, operand 0, single buffered']
    %16 = vsyncpa [#allocation4], 0
    %17 = vsyncpa [#allocation5], 0
    // Predicated region
    $region2: #{tpu_custom_call.1} parent=1 // pred_check
      _
    $region3: #{tpu_custom_call.1} parent=1 // pred_check_branch
      %19 = sbr.rel (0) target = $region5
    $region4: #{tpu_custom_call.1} parent=1 // pred_region
      _
    $region5: #{tpu_custom_call.1} parent=1 // pred_fallthru
      _
    // Predicated region
    $region6: #{tpu_custom_call.1} parent=1 // pred_check
      _
    $region7: #{tpu_custom_call.1} parent=1 // pred_check_branch
      %21 = sbr.rel (0) target = $region9
    $region8: #{tpu_custom_call.1} parent=1 // pred_region
      %s23 = ssub.s32 256, 256
      %24 = vsyncadd [#allocation4], %s23
      %s25 = sshll.u32 [#allocation3], 4
      %s26 = int_to_ptr.vmem [resolvable:$true] %s25
      %31 = dma.hbm_to_vmem [thread:$0]  %s1, 256, %s26, [#allocation4], 128, 128, 8
    $region9: #{tpu_custom_call.1} parent=1 // pred_fallthru
      _
    // Predicated region
    $region10: #{tpu_custom_call.1} parent=1 // pred_check
      _
    $region11: #{tpu_custom_call.1} parent=1 // pred_check_branch
      %33 = sbr.rel (0) target = $region13
    $region12: #{tpu_custom_call.1} parent=1 // pred_region
      _
    $region13: #{tpu_custom_call.1} parent=1 // pred_fallthru
      _
    // Predicated region
    $region14: #{tpu_custom_call.1} parent=1 // pred_check
      _
    $region15: #{tpu_custom_call.1} parent=1 // pred_check_branch
      %35 = sbr.rel (0) target = $region17
    $region16: #{tpu_custom_call.1} parent=1 // pred_region
      _
    $region17: #{tpu_custom_call.1} parent=1 // pred_fallthru
      _
    // Predicated region
    $region18: #{tpu_custom_call.1} parent=1 // pred_check
      _
    $region19: #{tpu_custom_call.1} parent=1 // pred_check_branch
      %37 = sbr.rel (0) target = $region21
    $region20: #{tpu_custom_call.1} parent=1 // pred_region
      _
    $region21: #{tpu_custom_call.1} parent=1 // pred_fallthru
      _
    // Predicated region
    $region22: #{tpu_custom_call.1} parent=1 // pred_check
      _
    $region23: #{tpu_custom_call.1} parent=1 // pred_check_branch
      %39 = sbr.rel (0) target = $region25
    $region24: #{tpu_custom_call.1} parent=1 // pred_region
      _
    $region25: #{tpu_custom_call.1} parent=1 // pred_fallthru
      _
    // Predicated region
    $region26: #{tpu_custom_call.1} parent=1 // pred_check
      _
    $region27: #{tpu_custom_call.1} parent=1 // pred_check_branch
      %41 = sbr.rel (0) target = $region29
    $region28: #{tpu_custom_call.1} parent=1 // pred_region
      _
    $region29: #{tpu_custom_call.1} parent=1 // pred_fallthru
      _
    // Predicated region
    $region30: #{tpu_custom_call.1} parent=1 // pred_check
      _
    $region31: #{tpu_custom_call.1} parent=1 // pred_check_branch
      %43 = sbr.rel (0) target = $region33
    $region32: #{tpu_custom_call.1} parent=1 // pred_region
      _
    $region33: #{tpu_custom_call.1} parent=1 // pred_fallthru
      _
    // Predicated region
    $region34: #{tpu_custom_call.1} parent=1 // pred_check
      _
    $region35: #{tpu_custom_call.1} parent=1 // pred_check_branch
      %45 = sbr.rel (0) target = $region37
    $region36: #{tpu_custom_call.1} parent=1 // pred_region
      _
    $region37: #{tpu_custom_call.1} parent=1 // pred_fallthru
      _
    // Predicated region
    $region38: #{tpu_custom_call.1} parent=1 // pred_check
      _
    $region39: #{tpu_custom_call.1} parent=1 // pred_check_branch
      %47 = sbr.rel (0) target = $region41
    $region40: #{tpu_custom_call.1} parent=1 // pred_region
      %48 = dma.done [#allocation4], 256
    $region41: #{tpu_custom_call.1} parent=1 // pred_fallthru
      _
    %v49 = vld [vmem:[%s0] sm:$0xff]
    %v50 = vld [vmem:[%s0 + $0x8] sm:$0xff]
    %v51 = vld [vmem:[%s0 + $0x10] sm:$0xff]
    %v52 = vld [vmem:[%s0 + $0x18] sm:$0xff]
    %v53 = vld [vmem:[#allocation3] sm:$0xff]
    %v54 = vld [vmem:[#allocation3 + $0x8] sm:$0xff]
    %v55 = vld [vmem:[%s2] sm:$0xff]
    %v56 = vld [vmem:[%s2 + $0x8] sm:$0xff]
    %58 = vset.pattern.permute.xlu0 0
    %59 = vperm.xlu0 %58, %v55
    %v60 = vpop.permute.xlu0 %59
    %63 = vset.pattern.permute.xlu0 0
    %64 = vperm.xlu0 %63, %v56
    %v65 = vpop.permute.xlu0 %64
    %vm67 = vcmask 261120
    %v69 = vsel %vm67, %v53, 0
    %v72 = vsel %vm67, %v54, 0
    %74 = vmatprep.subr.mxu0 0.0
    %75 = vmatpush1.msra.mxu0 %v49
    %76 = vmatprep.subr.mxu0 0.0
    %77 = vmatpush1.msra.mxu0 %v50
    %78 = vmatprep.subr.mxu0 0.0
    %79 = vmatpush1.msra.mxu0 %v51
    %80 = vmatprep.subr.mxu0 0.0
    %81 = vmatpush1.msra.mxu0 %v52
    %82 = vmatprep.subr.mxu0 0.0
    %83 = vmatpush1.msra.mxu0 0.0
    %84 = vmatprep.subr.mxu0 0.0
    %85 = vmatpush1.msra.mxu0 0.0
    %86 = vmatprep.subr.mxu0 0.0
    %87 = vmatpush1.msra.mxu0 0.0
    %88 = vmatprep.subr.mxu0 0.0
    %89 = vmatpush1.msra.mxu0 0.0
    %90 = vmatprep.subr.mxu0 0.0
    %91 = vmatpush1.msra.mxu0 0.0
    %92 = vmatprep.subr.mxu0 0.0
    %93 = vmatpush1.msra.mxu0 0.0
    %94 = vmatprep.subr.mxu0 0.0
    %95 = vmatpush1.msra.mxu0 0.0
    %96 = vmatprep.subr.mxu0 0.0
    %97 = vmatpush1.msra.mxu0 0.0
    %98 = vmatprep.subr.mxu0 0.0
    %99 = vmatpush1.msra.mxu0 0.0
    %100 = vmatprep.subr.mxu0 0.0
    %101 = vmatpush1.msra.mxu0 0.0
    %102 = vmatprep.subr.mxu0 0.0
    %103 = vmatpush1.msra.mxu0 0.0
    %104 = vmatprep.subr.mxu0 0.0
    %105 = vmatpush1.msra.mxu0 0.0
    %106 = vmatprep.subr.mxu0 0.0
    %107 = vmatpush1.msra.mxu0 0.0
    %108 = vmatprep.subr.mxu0 0.0
    %109 = vmatpush1.msra.mxu0 0.0
    %110 = vmatprep.subr.mxu0 0.0
    %111 = vmatpush1.msra.mxu0 0.0
    %112 = vmatprep.subr.mxu0 0.0
    %113 = vmatpush1.msra.mxu0 0.0
    %114 = vmatprep.subr.mxu0 0.0
    %115 = vmatpush1.msra.mxu0 0.0
    %116 = vmatprep.subr.mxu0 0.0
    %117 = vmatpush1.msra.mxu0 0.0
    %118 = vmatprep.subr.mxu0 0.0
    %119 = vmatpush1.msra.mxu0 0.0
    %120 = vmatprep.subr.mxu0 0.0
    %121 = vmatpush1.msra.mxu0 0.0
    %122 = vmatprep.subr.mxu0 0.0
    %123 = vmatpush1.msra.mxu0 0.0
    %124 = vmatprep.subr.mxu0 0.0
    %125 = vmatpush1.msra.mxu0 0.0
    %126 = vmatprep.subr.mxu0 0.0
    %127 = vmatpush1.msra.mxu0 0.0
    %128 = vmatprep.subr.mxu0 0.0
    %129 = vmatpush1.msra.mxu0 0.0
    %130 = vmatprep.subr.mxu0 0.0
    %131 = vmatpush1.msra.mxu0 0.0
    %132 = vmatprep.subr.mxu0 0.0
    %133 = vmatpush1.msra.mxu0 0.0
    %134 = vmatprep.subr.mxu0 0.0
    %135 = vmatpush1.msra.mxu0 0.0
    %136 = vmatprep.subr.mxu0 0.0
    %137 = vmatpush1.msra.mxu0 0.0
    %138 = vmatprep.mubr.f32.mxu0 0.0
    %139 = vmatmul.mubr.f32.gmra.mrb[0].mxu0 %v69
    %v140 = vpop.f32.mrb[0].mxu0
    %v141 = vadd.f32 %v60, %v140
    %v142 = vpop.f32.mrb[0].mxu0
    %143 = vmatprep.mubr.f32.mxu0 0.0
    %144 = vmatmul.mubr.f32.gmra.mrb[0].mxu0 %v72
    %v145 = vpop.f32.mrb[0].mxu0
    %v146 = vadd.f32 %v65, %v145
    %v147 = vpop.f32.mrb[0].mxu0
    %148 = vdwg.mxu0
    %vm149 = vcmp.gt.f32.partialorder %v141, 0.0
    %vm150 = vcmp.gt.f32.partialorder %v146, 0.0
    %v151 = vmul.f32 %v141, 1.442695
    %v152 = vpow.pop %v151
    %v153 = vmul.f32 %v146, 1.442695
    %v154 = vpow.pop %v153
    %v155 = vsub.f32 %v152, 1.0
    %v156 = vsub.f32 %v154, 1.0
    %v157 = vmul.f32 %v155, 1.6732632
    %v158 = vmul.f32 %v156, 1.6732632
    %v159 = vsel %vm149, %v141, %v157
    %v160 = vsel %vm150, %v146, %v158
    %v161 = vld [vmem:[%s3] sm:$0xff]
    %v162 = vld [vmem:[%s4] sm:$0xff]
    %164 = vset.pattern.permute.xlu0 0
    %165 = vperm.xlu0 %164, %v162
    %v166 = vpop.permute.xlu0 %165
    %vm168 = vcmask 130048
    %v170 = vsel %vm168, %v161, 0
    %172 = vmatprep.subr.mxu0 0.0
    %173 = vmatpush1.msra.mxu0 %v159
    %174 = vmatprep.subr.mxu0 0.0
    %175 = vmatpush1.msra.mxu0 %v160
    %176 = vmatprep.subr.mxu0 0.0
    %177 = vmatpush1.msra.mxu0 0.0
    %178 = vmatprep.subr.mxu0 0.0
    %179 = vmatpush1.msra.mxu0 0.0
    %180 = vmatprep.subr.mxu0 0.0
    %181 = vmatpush1.msra.mxu0 0.0
    %182 = vmatprep.subr.mxu0 0.0
    %183 = vmatpush1.msra.mxu0 0.0
    %184 = vmatprep.subr.mxu0 0.0
    %185 = vmatpush1.msra.mxu0 0.0
    %186 = vmatprep.subr.mxu0 0.0
    %187 = vmatpush1.msra.mxu0 0.0
    %188 = vmatprep.subr.mxu0 0.0
    %189 = vmatpush1.msra.mxu0 0.0
    %190 = vmatprep.subr.mxu0 0.0
    %191 = vmatpush1.msra.mxu0 0.0
    %192 = vmatprep.subr.mxu0 0.0
    %193 = vmatpush1.msra.mxu0 0.0
    %194 = vmatprep.subr.mxu0 0.0
    %195 = vmatpush1.msra.mxu0 0.0
    %196 = vmatprep.subr.mxu0 0.0
    %197 = vmatpush1.msra.mxu0 0.0
    %198 = vmatprep.subr.mxu0 0.0
    %199 = vmatpush1.msra.mxu0 0.0
    %200 = vmatprep.subr.mxu0 0.0
    %201 = vmatpush1.msra.mxu0 0.0
    %202 = vmatprep.subr.mxu0 0.0
    %203 = vmatpush1.msra.mxu0 0.0
    %204 = vmatprep.subr.mxu0 0.0
    %205 = vmatpush1.msra.mxu0 0.0
    %206 = vmatprep.subr.mxu0 0.0
    %207 = vmatpush1.msra.mxu0 0.0
    %208 = vmatprep.subr.mxu0 0.0
    %209 = vmatpush1.msra.mxu0 0.0
    %210 = vmatprep.subr.mxu0 0.0
    %211 = vmatpush1.msra.mxu0 0.0
    %212 = vmatprep.subr.mxu0 0.0
    %213 = vmatpush1.msra.mxu0 0.0
    %214 = vmatprep.subr.mxu0 0.0
    %215 = vmatpush1.msra.mxu0 0.0
    %216 = vmatprep.subr.mxu0 0.0
    %217 = vmatpush1.msra.mxu0 0.0
    %218 = vmatprep.subr.mxu0 0.0
    %219 = vmatpush1.msra.mxu0 0.0
    %220 = vmatprep.subr.mxu0 0.0
    %221 = vmatpush1.msra.mxu0 0.0
    %222 = vmatprep.subr.mxu0 0.0
    %223 = vmatpush1.msra.mxu0 0.0
    %224 = vmatprep.subr.mxu0 0.0
    %225 = vmatpush1.msra.mxu0 0.0
    %226 = vmatprep.subr.mxu0 0.0
    %227 = vmatpush1.msra.mxu0 0.0
    %228 = vmatprep.subr.mxu0 0.0
    %229 = vmatpush1.msra.mxu0 0.0
    %230 = vmatprep.subr.mxu0 0.0
    %231 = vmatpush1.msra.mxu0 0.0
    %232 = vmatprep.subr.mxu0 0.0
    %233 = vmatpush1.msra.mxu0 0.0
    %234 = vmatprep.subr.mxu0 0.0
    %235 = vmatpush1.msra.mxu0 0.0
    %236 = vmatprep.mubr.f32.mxu0 0.0
    %237 = vmatmul.mubr.f32.gmra.mrb[0].mxu0 %v170
    %v238 = vpop.f32.mrb[0].mxu0
    %v239 = vadd.f32 %v166, %v238
    %v240 = vpop.f32.mrb[0].mxu0
    %241 = vdwg.mxu0
    %vm242 = vcmp.gt.f32.partialorder %v239, 0.0
    %v243 = vmul.f32 %v239, 1.442695
    %v244 = vpow.pop %v243
    %v245 = vsub.f32 %v244, 1.0
    %v246 = vmul.f32 %v245, 1.6732632
    %v247 = vsel %vm242, %v239, %v246
    %v248 = vld [vmem:[%s5] sm:$0xf]
    %v249 = vld [vmem:[%s6] sm:$0xf]
    %251 = vset.pattern.permute.xlu0 0
    %252 = vperm.xlu0 %251, %v249
    %v253 = vpop.permute.xlu0 %252
    %vm255 = vcmask 64512
    %v257 = vsel %vm255, %v248, 0
    %259 = vmatprep.subr.mxu0 0.0
    %260 = vmatpush1.msra.mxu0 %v247
    %261 = vmatprep.subr.mxu0 0.0
    %262 = vmatpush1.msra.mxu0 0.0
    %263 = vmatprep.subr.mxu0 0.0
    %264 = vmatpush1.msra.mxu0 0.0
    %265 = vmatprep.subr.mxu0 0.0
    %266 = vmatpush1.msra.mxu0 0.0
    %267 = vmatprep.subr.mxu0 0.0
    %268 = vmatpush1.msra.mxu0 0.0
    %269 = vmatprep.subr.mxu0 0.0
    %270 = vmatpush1.msra.mxu0 0.0
    %271 = vmatprep.subr.mxu0 0.0
    %272 = vmatpush1.msra.mxu0 0.0
    %273 = vmatprep.subr.mxu0 0.0
    %274 = vmatpush1.msra.mxu0 0.0
    %275 = vmatprep.subr.mxu0 0.0
    %276 = vmatpush1.msra.mxu0 0.0
    %277 = vmatprep.subr.mxu0 0.0
    %278 = vmatpush1.msra.mxu0 0.0
    %279 = vmatprep.subr.mxu0 0.0
    %280 = vmatpush1.msra.mxu0 0.0
    %281 = vmatprep.subr.mxu0 0.0
    %282 = vmatpush1.msra.mxu0 0.0
    %283 = vmatprep.subr.mxu0 0.0
    %284 = vmatpush1.msra.mxu0 0.0
    %285 = vmatprep.subr.mxu0 0.0
    %286 = vmatpush1.msra.mxu0 0.0
    %287 = vmatprep.subr.mxu0 0.0
    %288 = vmatpush1.msra.mxu0 0.0
    %289 = vmatprep.subr.mxu0 0.0
    %290 = vmatpush1.msra.mxu0 0.0
    %291 = vmatprep.subr.mxu0 0.0
    %292 = vmatpush1.msra.mxu0 0.0
    %293 = vmatprep.subr.mxu0 0.0
    %294 = vmatpush1.msra.mxu0 0.0
    %295 = vmatprep.subr.mxu0 0.0
    %296 = vmatpush1.msra.mxu0 0.0
    %297 = vmatprep.subr.mxu0 0.0
    %298 = vmatpush1.msra.mxu0 0.0
    %299 = vmatprep.subr.mxu0 0.0
    %300 = vmatpush1.msra.mxu0 0.0
    %301 = vmatprep.subr.mxu0 0.0
    %302 = vmatpush1.msra.mxu0 0.0
    %303 = vmatprep.subr.mxu0 0.0
    %304 = vmatpush1.msra.mxu0 0.0
    %305 = vmatprep.subr.mxu0 0.0
    %306 = vmatpush1.msra.mxu0 0.0
    %307 = vmatprep.subr.mxu0 0.0
    %308 = vmatpush1.msra.mxu0 0.0
    %309 = vmatprep.subr.mxu0 0.0
    %310 = vmatpush1.msra.mxu0 0.0
    %311 = vmatprep.subr.mxu0 0.0
    %312 = vmatpush1.msra.mxu0 0.0
    %313 = vmatprep.subr.mxu0 0.0
    %314 = vmatpush1.msra.mxu0 0.0
    %315 = vmatprep.subr.mxu0 0.0
    %316 = vmatpush1.msra.mxu0 0.0
    %317 = vmatprep.subr.mxu0 0.0
    %318 = vmatpush1.msra.mxu0 0.0
    %319 = vmatprep.subr.mxu0 0.0
    %320 = vmatpush1.msra.mxu0 0.0
    %321 = vmatprep.subr.mxu0 0.0
    %322 = vmatpush1.msra.mxu0 0.0
    %323 = vmatprep.mubr.f32.mxu0 0.0
    %324 = vmatmul.mubr.f32.gmra.mrb[0].mxu0 %v257
    %v325 = vpop.f32.mrb[0].mxu0
    %v326 = vadd.f32 %v253, %v325
    %v327 = vpop.f32.mrb[0].mxu0
    %328 = vdwg.mxu0
    %vm329 = vcmp.gt.f32.partialorder %v326, 0.0
    %v330 = vmul.f32 %v326, 1.442695
    %v331 = vpow.pop %v330
    %v332 = vsub.f32 %v331, 1.0
    %v333 = vmul.f32 %v332, 1.6732632
    %v334 = vsel %vm329, %v326, %v333
    %v335 = vld [vmem:[%s7] sm:$0x1]
    %v336 = vld [vmem:[#allocation2] sm:$0x1]
    %338 = vset.pattern.permute.xlu0 0
    %339 = vperm.xlu0 %338, %v336
    %v340 = vpop.permute.xlu0 %339
    %v342 = vlaneseq
    %v343 = vshrl.u32 %v342, 7
    %v344 = vsub.s32 0, %v343
    %v345 = vrot.slane %v340, %v344
    %vm346 = vcmask 31744
    %v348 = vsel %vm346, %v335, 0
    %vm350 = vcmask 1043456
    %v352 = vsel %vm350, %v334, 0
    %354 = vmatprep.subr.mxu0 0.0
    %355 = vmatpush1.msra.mxu0 %v352
    %356 = vmatprep.subr.mxu0 0.0
    %357 = vmatpush1.msra.mxu0 0.0
    %358 = vmatprep.subr.mxu0 0.0
    %359 = vmatpush1.msra.mxu0 0.0
    %360 = vmatprep.subr.mxu0 0.0
    %361 = vmatpush1.msra.mxu0 0.0
    %362 = vmatprep.subr.mxu0 0.0
    %363 = vmatpush1.msra.mxu0 0.0
    %364 = vmatprep.subr.mxu0 0.0
    %365 = vmatpush1.msra.mxu0 0.0
    %366 = vmatprep.subr.mxu0 0.0
    %367 = vmatpush1.msra.mxu0 0.0
    %368 = vmatprep.subr.mxu0 0.0
    %369 = vmatpush1.msra.mxu0 0.0
    %370 = vmatprep.subr.mxu0 0.0
    %371 = vmatpush1.msra.mxu0 0.0
    %372 = vmatprep.subr.mxu0 0.0
    %373 = vmatpush1.msra.mxu0 0.0
    %374 = vmatprep.subr.mxu0 0.0
    %375 = vmatpush1.msra.mxu0 0.0
    %376 = vmatprep.subr.mxu0 0.0
    %377 = vmatpush1.msra.mxu0 0.0
    %378 = vmatprep.subr.mxu0 0.0
    %379 = vmatpush1.msra.mxu0 0.0
    %380 = vmatprep.subr.mxu0 0.0
    %381 = vmatpush1.msra.mxu0 0.0
    %382 = vmatprep.subr.mxu0 0.0
    %383 = vmatpush1.msra.mxu0 0.0
    %384 = vmatprep.subr.mxu0 0.0
    %385 = vmatpush1.msra.mxu0 0.0
    %386 = vmatprep.subr.mxu0 0.0
    %387 = vmatpush1.msra.mxu0 0.0
    %388 = vmatprep.subr.mxu0 0.0
    %389 = vmatpush1.msra.mxu0 0.0
    %390 = vmatprep.subr.mxu0 0.0
    %391 = vmatpush1.msra.mxu0 0.0
    %392 = vmatprep.subr.mxu0 0.0
    %393 = vmatpush1.msra.mxu0 0.0
    %394 = vmatprep.subr.mxu0 0.0
    %395 = vmatpush1.msra.mxu0 0.0
    %396 = vmatprep.subr.mxu0 0.0
    %397 = vmatpush1.msra.mxu0 0.0
    %398 = vmatprep.subr.mxu0 0.0
    %399 = vmatpush1.msra.mxu0 0.0
    %400 = vmatprep.subr.mxu0 0.0
    %401 = vmatpush1.msra.mxu0 0.0
    %402 = vmatprep.subr.mxu0 0.0
    %403 = vmatpush1.msra.mxu0 0.0
    %404 = vmatprep.subr.mxu0 0.0
    %405 = vmatpush1.msra.mxu0 0.0
    %406 = vmatprep.subr.mxu0 0.0
    %407 = vmatpush1.msra.mxu0 0.0
    %408 = vmatprep.subr.mxu0 0.0
    %409 = vmatpush1.msra.mxu0 0.0
    %410 = vmatprep.subr.mxu0 0.0
    %411 = vmatpush1.msra.mxu0 0.0
    %412 = vmatprep.subr.mxu0 0.0
    %413 = vmatpush1.msra.mxu0 0.0
    %414 = vmatprep.subr.mxu0 0.0
    %415 = vmatpush1.msra.mxu0 0.0
    %416 = vmatprep.subr.mxu0 0.0
    %417 = vmatpush1.msra.mxu0 0.0
    %418 = vmatprep.mubr.f32.mxu0 0.0
    %419 = vmatmul.mubr.f32.gmra.mrb[0].mxu0 %v348
    %v420 = vpop.f32.mrb[0].mxu0
    %v421 = vadd.f32 %v345, %v420
    %v422 = vpop.f32.mrb[0].mxu0
    %423 = vdwg.mxu0
    %v424 = vsub.f32 0.0, %v421
    %v425 = vmul.f32 %v424, 1.442695
    %v426 = vpow.pop %v425
    %v427 = vadd.f32 %v426, 1.0
    %v428 = vrcp.pop %v427
    %429 = vst [vmem:[#allocation6] sm:$0x1] %v428
    // Predicated region
    $region42: #{tpu_custom_call.1} parent=1 // pred_check
      _
    $region43: #{tpu_custom_call.1} parent=1 // pred_check_branch
      %431 = sbr.rel (0) target = $region45
    $region44: #{tpu_custom_call.1} parent=1 // pred_region
      %s433 = ssub.s32 16, 16
      %434 = vsyncadd [#allocation5], %s433
      %s436 = sshll.u32 [#allocation6], 4
      %s437 = int_to_ptr.vmem [resolvable:$true] %s436
      %439 = dma.vmem_to_hbm [thread:$0]  %s437, 16, %s9, [#allocation5]
    $region45: #{tpu_custom_call.1} parent=1 // pred_fallthru
      _
    // Predicated region
    $region46: #{tpu_custom_call.1} parent=1 // pred_check
      _
    $region47: #{tpu_custom_call.1} parent=1 // pred_check_branch
      %441 = sbr.rel (0) target = $region49
    $region48: #{tpu_custom_call.1} parent=1 // pred_region
      %442 = dma.done [#allocation5], 16
    $region49: #{tpu_custom_call.1} parent=1 // pred_fallthru
      _
    %443 = vsyncpa [#allocation4], 1
    %444 = vsyncpa [#allocation5], 1

</llo_original>
